<compile_context>
chip_gen: v6e
topology: v6e:2x2x1
jax: 0.10.0
libtpu: 0.0.40
codegen_flags: <defaults>
</compile_context>

<pallas_src>
import jax
import jax.numpy as jnp
from jax.experimental import pallas as pl
from jax.experimental.pallas import tpu as pltpu

IN_DIM = 28 * 28
HID = 64
OUT_DIM = 10


def mlp_kernel(x_ref,
               w1_ref, b1_ref,
               w2_ref, b2_ref,
               w3_ref, b3_ref,
               w4_ref, b4_ref,
               out_ref):
    # One (TILE_B, 784) f32 batch tile per grid step; cast to bf16 here (fused)
    # instead of in a standalone XLA op that would round-trip x through HBM.
    x = x_ref[...].astype(jnp.bfloat16)

    h = jnp.dot(x, w1_ref[...], preferred_element_type=jnp.float32) + b1_ref[...]
    h = jnp.maximum(h, 0.0)

    h = jnp.dot(h.astype(jnp.bfloat16), w2_ref[...],
                preferred_element_type=jnp.float32) + b2_ref[...]
    h = jnp.maximum(h, 0.0)

    h = jnp.dot(h.astype(jnp.bfloat16), w3_ref[...],
                preferred_element_type=jnp.float32) + b3_ref[...]
    h = jnp.maximum(h, 0.0)

    logits = jnp.dot(h.astype(jnp.bfloat16), w4_ref[...],
                     preferred_element_type=jnp.float32) + b4_ref[...]

    # log_softmax along dim=1 (class axis), numerically stable, in f32.
    m = jnp.max(logits, axis=-1, keepdims=True)
    shifted = logits - m
    lse = jnp.log(jnp.sum(jnp.exp(shifted), axis=-1, keepdims=True))
    out_ref[...] = (shifted - lse).astype(out_ref.dtype)


def _round_up(n, m):
    return ((n + m - 1) // m) * m


def _choose_tile(B, tile_b):
    """Pick the batch tile: a multiple of 16, at most `tile_b`, preferring
    (a) a tile that divides B exactly (skips the jnp.pad HBM round trip) and
    (b) a grid of >= 2 steps (pipelining + v7x megacore sharding)."""
    cap = max(16, min(_round_up(tile_b, 16), _round_up(B, 16)))
    if B > 16:
        # shrink rather than run a 1-step grid (keeps both v7x TCs busy and
        # lets BlockSpec double-buffering actually overlap DMA with compute)
        cap = min(cap, max(16, _round_up((B + 1) // 2, 16)))
    for t in range(cap, 15, -16):      # largest multiple of 16 dividing B
        if B % t == 0:
            return t
    return cap                          # fall back to padding the batch


def net_forward(x, params, tile_b=1024):
    """x: (B, 784) float32.  params: dict of f32 weights/biases (weights stored
    (in, out)).  Returns (B, 10) float32 log-probabilities.

    tile_b: upper bound on the batch tile.  1024 is a good default for
    v5e/v6e; on v7x pass 2048-4096 (still far under the 32 MiB scoped VMEM)."""
    B = x.shape[0]
    tile = _choose_tile(B, tile_b)
    Bp = _round_up(B, tile)

    # Pad only when unavoidable (padded rows are independent, sliced off below).
    xp = x if Bp == B else jnp.pad(x, ((0, Bp - B), (0, 0)))

    # bf16 weights (MXU-native, tiny, VMEM-resident); f32 biases.
    w1 = params["w1"].astype(jnp.bfloat16)
    w2 = params["w2"].astype(jnp.bfloat16)
    w3 = params["w3"].astype(jnp.bfloat16)
    w4 = params["w4"].astype(jnp.bfloat16)
    b1 = params["b1"].astype(jnp.float32)
    b2 = params["b2"].astype(jnp.float32)
    b3 = params["b3"].astype(jnp.float32)
    b4 = params["b4"].astype(jnp.float32)

    # Constant index_map -> weights/biases stay resident in VMEM across the grid.
    const = lambda a: pl.BlockSpec(a.shape, lambda i: (0, 0))

    weight_bytes = sum(int(a.size) * a.dtype.itemsize
                       for a in (w1, w2, w3, w4, b1, b2, b3, b4))
    flops = 2 * Bp * (IN_DIM * HID + HID * HID + HID * HID + HID * OUT_DIM)
    cost = pl.CostEstimate(
        flops=flops,
        transcendentals=Bp * (OUT_DIM + 1),                 # exp per class + log per row
        bytes_accessed=Bp * IN_DIM * 4 + Bp * OUT_DIM * 4 + weight_bytes,
    )

    out = pl.pallas_call(
        mlp_kernel,
        out_shape=jax.ShapeDtypeStruct((Bp, OUT_DIM), jnp.float32),
        grid=(Bp // tile,),
        in_specs=[pl.BlockSpec((tile, IN_DIM), lambda i: (i, 0)),  # streamed f32 x tiles
                  const(w1), const(b1),
                  const(w2), const(b2),
                  const(w3), const(b3),
                  const(w4), const(b4)],
        out_specs=pl.BlockSpec((tile, OUT_DIM), lambda i: (i, 0)),
        compiler_params=pltpu.CompilerParams(
            dimension_semantics=("parallel",),   # megacore sharding on v7x
            vmem_limit_bytes=32 << 20,           # v5e scoped default is 16 MiB
        ),
        cost_estimate=cost,
    )(xp, w1, b1, w2, b2, w3, b3, w4, b4)

    return out[:B]


def net_reference(x, params):
    """Pure-JAX f32 reference of the PyTorch forward pass."""
    h = jnp.maximum(x @ params["w1"] + params["b1"], 0.0)
    h = jnp.maximum(h @ params["w2"] + params["b2"], 0.0)
    h = jnp.maximum(h @ params["w3"] + params["b3"], 0.0)
    logits = h @ params["w4"] + params["b4"]
    return jax.nn.log_softmax(logits, axis=-1)


def init_params(key):
    """Deterministic init matching nn.Linear default: U(-1/sqrt(fan_in), +1/sqrt(fan_in))."""
    def linear(k, fan_in, fan_out):
        kw, kb = jax.random.split(k)
        bound = 1.0 / jnp.sqrt(fan_in)
        # stored transposed: (in, out) so the kernel computes x @ W
        w = jax.random.uniform(kw, (fan_in, fan_out), jnp.float32, -bound, bound)
        b = jax.random.uniform(kb, (1, fan_out), jnp.float32, -bound, bound)
        return w, b

    k1, k2, k3, k4 = jax.random.split(key, 4)
    w1, b1 = linear(k1, IN_DIM, HID)
    w2, b2 = linear(k2, HID, HID)
    w3, b3 = linear(k3, HID, HID)
    w4, b4 = linear(k4, HID, OUT_DIM)
    return {"w1": w1, "b1": b1, "w2": w2, "b2": b2,
            "w3": w3, "b3": b3, "w4": w4, "b4": b4}


if __name__ == "__main__":
    key = jax.random.PRNGKey(0)
    kp, kx = jax.random.split(key)
    params = init_params(kp)

    batch = 8
    x = jax.random.normal(kx, (batch, IN_DIM), jnp.float32)

    out = net_forward(x, params)
    out = jax.block_until_ready(out)

    # Sanity: shape, rows sum (in prob space) to ~1, and match to f32 reference
    # within bf16-matmul tolerance.
    assert out.shape == (batch, OUT_DIM)
    row_sums = jnp.sum(jnp.exp(out), axis=1)
    assert bool(jnp.all(jnp.abs(row_sums - 1.0) < 1e-4))
    ref = net_reference(x, params)
    assert bool(jnp.max(jnp.abs(out - ref)) < 5e-2)

    print("KERNEL_OK")
</pallas_src>

<mosaic_0001>
module attributes {stable_mosaic.version = 11 : i64} {
  func.func @mlp_kernel(%arg0: i32, %arg1: memref<16x784xf32, #tpu.memory_space<vmem>>, %arg2: memref<784x64xbf16, #tpu.memory_space<vmem>>, %arg3: memref<1x64xf32, #tpu.memory_space<vmem>>, %arg4: memref<64x64xbf16, #tpu.memory_space<vmem>>, %arg5: memref<1x64xf32, #tpu.memory_space<vmem>>, %arg6: memref<64x64xbf16, #tpu.memory_space<vmem>>, %arg7: memref<1x64xf32, #tpu.memory_space<vmem>>, %arg8: memref<64x10xbf16, #tpu.memory_space<vmem>>, %arg9: memref<1x10xf32, #tpu.memory_space<vmem>>, %arg10: memref<16x10xf32, #tpu.memory_space<vmem>>) attributes {dimension_semantics = [#tpu.dimension_semantics<parallel>], iteration_bounds = array<i64: 1>, scalar_prefetch = 0 : i64, scratch_operands = 0 : i64, tpu.core_type = #tpu.core_type<tc>, window_params = [{transform_indices = @transform_0, window_bounds = array<i64: 16, 784>}, {pipeline_mode = #tpu.pipeline_mode<synchronous>, transform_indices = @transform_1, window_bounds = array<i64: 784, 64>}, {pipeline_mode = #tpu.pipeline_mode<synchronous>, transform_indices = @transform_2, window_bounds = array<i64: 1, 64>}, {pipeline_mode = #tpu.pipeline_mode<synchronous>, transform_indices = @transform_3, window_bounds = array<i64: 64, 64>}, {pipeline_mode = #tpu.pipeline_mode<synchronous>, transform_indices = @transform_4, window_bounds = array<i64: 1, 64>}, {pipeline_mode = #tpu.pipeline_mode<synchronous>, transform_indices = @transform_5, window_bounds = array<i64: 64, 64>}, {pipeline_mode = #tpu.pipeline_mode<synchronous>, transform_indices = @transform_6, window_bounds = array<i64: 1, 64>}, {pipeline_mode = #tpu.pipeline_mode<synchronous>, transform_indices = @transform_7, window_bounds = array<i64: 64, 10>}, {pipeline_mode = #tpu.pipeline_mode<synchronous>, transform_indices = @transform_8, window_bounds = array<i64: 1, 10>}, {transform_indices = @transform_9, window_bounds = array<i64: 16, 10>}]} {
    %c0 = arith.constant 0 : index
    %c0_0 = arith.constant 0 : index
    %0 = vector.load %arg1[%c0, %c0_0] : memref<16x784xf32, #tpu.memory_space<vmem>>, vector<16x784xf32>
    %1 = arith.truncf %0 : vector<16x784xf32> to vector<16x784xbf16>
    %c0_1 = arith.constant 0 : index
    %c0_2 = arith.constant 0 : index
    %2 = vector.load %arg2[%c0_1, %c0_2] : memref<784x64xbf16, #tpu.memory_space<vmem>>, vector<784x64xbf16>
    %cst = arith.constant dense<0.000000e+00> : vector<16x64xf32>
    %3 = tpu.matmul %1, %2, %cst {dimension_numbers = #tpu.dot_dimension_numbers<[1], [0], [0], [1], [0, 0, 1, 1], [], []>} : vector<16x784xbf16>, vector<784x64xbf16>, vector<16x64xf32> -> vector<16x64xf32>
    %c0_3 = arith.constant 0 : index
    %c0_4 = arith.constant 0 : index
    %4 = vector.load %arg3[%c0_3, %c0_4] : memref<1x64xf32, #tpu.memory_space<vmem>>, vector<1x64xf32>
    %5 = vector.broadcast %4 : vector<1x64xf32> to vector<16x64xf32>
    %6 = arith.addf %3, %5 : vector<16x64xf32>
    %cst_5 = arith.constant 0.000000e+00 : f32
    %7 = vector.broadcast %cst_5 : f32 to vector<16x64xf32>
    %8 = arith.maximumf %6, %7 : vector<16x64xf32>
    %9 = arith.truncf %8 : vector<16x64xf32> to vector<16x64xbf16>
    %c0_6 = arith.constant 0 : index
    %c0_7 = arith.constant 0 : index
    %10 = vector.load %arg4[%c0_6, %c0_7] : memref<64x64xbf16, #tpu.memory_space<vmem>>, vector<64x64xbf16>
    %cst_8 = arith.constant dense<0.000000e+00> : vector<16x64xf32>
    %11 = tpu.matmul %9, %10, %cst_8 {dimension_numbers = #tpu.dot_dimension_numbers<[1], [0], [0], [1], [0, 0, 1, 1], [], []>} : vector<16x64xbf16>, vector<64x64xbf16>, vector<16x64xf32> -> vector<16x64xf32>
    %c0_9 = arith.constant 0 : index
    %c0_10 = arith.constant 0 : index
    %12 = vector.load %arg5[%c0_9, %c0_10] : memref<1x64xf32, #tpu.memory_space<vmem>>, vector<1x64xf32>
    %13 = vector.broadcast %12 : vector<1x64xf32> to vector<16x64xf32>
    %14 = arith.addf %11, %13 : vector<16x64xf32>
    %cst_11 = arith.constant 0.000000e+00 : f32
    %15 = vector.broadcast %cst_11 : f32 to vector<16x64xf32>
    %16 = arith.maximumf %14, %15 : vector<16x64xf32>
    %17 = arith.truncf %16 : vector<16x64xf32> to vector<16x64xbf16>
    %c0_12 = arith.constant 0 : index
    %c0_13 = arith.constant 0 : index
    %18 = vector.load %arg6[%c0_12, %c0_13] : memref<64x64xbf16, #tpu.memory_space<vmem>>, vector<64x64xbf16>
    %cst_14 = arith.constant dense<0.000000e+00> : vector<16x64xf32>
    %19 = tpu.matmul %17, %18, %cst_14 {dimension_numbers = #tpu.dot_dimension_numbers<[1], [0], [0], [1], [0, 0, 1, 1], [], []>} : vector<16x64xbf16>, vector<64x64xbf16>, vector<16x64xf32> -> vector<16x64xf32>
    %c0_15 = arith.constant 0 : index
    %c0_16 = arith.constant 0 : index
    %20 = vector.load %arg7[%c0_15, %c0_16] : memref<1x64xf32, #tpu.memory_space<vmem>>, vector<1x64xf32>
    %21 = vector.broadcast %20 : vector<1x64xf32> to vector<16x64xf32>
    %22 = arith.addf %19, %21 : vector<16x64xf32>
    %cst_17 = arith.constant 0.000000e+00 : f32
    %23 = vector.broadcast %cst_17 : f32 to vector<16x64xf32>
    %24 = arith.maximumf %22, %23 : vector<16x64xf32>
    %25 = arith.truncf %24 : vector<16x64xf32> to vector<16x64xbf16>
    %c0_18 = arith.constant 0 : index
    %c0_19 = arith.constant 0 : index
    %26 = vector.load %arg8[%c0_18, %c0_19] : memref<64x10xbf16, #tpu.memory_space<vmem>>, vector<64x10xbf16>
    %cst_20 = arith.constant dense<0.000000e+00> : vector<16x10xf32>
    %27 = tpu.matmul %25, %26, %cst_20 {dimension_numbers = #tpu.dot_dimension_numbers<[1], [0], [0], [1], [0, 0, 1, 1], [], []>} : vector<16x64xbf16>, vector<64x10xbf16>, vector<16x10xf32> -> vector<16x10xf32>
    %c0_21 = arith.constant 0 : index
    %c0_22 = arith.constant 0 : index
    %28 = vector.load %arg9[%c0_21, %c0_22] : memref<1x10xf32, #tpu.memory_space<vmem>>, vector<1x10xf32>
    %29 = vector.broadcast %28 : vector<1x10xf32> to vector<16x10xf32>
    %30 = arith.addf %27, %29 : vector<16x10xf32>
    %cst_23 = arith.constant dense<0xFF800000> : vector<16xf32>
    %31 = vector.multi_reduction <maximumf>, %30, %cst_23 [1] : vector<16x10xf32> to vector<16xf32>
    %32 = vector.shape_cast %31 : vector<16xf32> to vector<16x1xf32>
    %33 = vector.broadcast %32 : vector<16x1xf32> to vector<16x10xf32>
    %34 = arith.subf %30, %33 : vector<16x10xf32>
    %35 = math.exp %34 : vector<16x10xf32>
    %cst_24 = arith.constant dense<0.000000e+00> : vector<16xf32>
    %36 = vector.multi_reduction <add>, %35, %cst_24 [1] : vector<16x10xf32> to vector<16xf32>
    %37 = vector.shape_cast %36 : vector<16xf32> to vector<16x1xf32>
    %38 = math.log %37 : vector<16x1xf32>
    %39 = vector.broadcast %38 : vector<16x1xf32> to vector<16x10xf32>
    %40 = arith.subf %34, %39 : vector<16x10xf32>
    %c0_25 = arith.constant 0 : index
    %c0_26 = arith.constant 0 : index
    %41 = vector.load %arg10[%c0_25, %c0_26] : memref<16x10xf32, #tpu.memory_space<vmem>>, vector<16x10xf32>
    tpu.vector_store %arg10[%c0_25, %c0_26], %40 {strides = array<i32>} : memref<16x10xf32, #tpu.memory_space<vmem>>, vector<16x10xf32>,
    return
  }
  func.func @transform_0(%arg0: i32) -> (i32, i32) {
    %c0_i32 = arith.constant 0 : i32
    %c0_i32_0 = arith.constant 0 : i32
    return %arg0, %c0_i32 : i32, i32
  }
  func.func @transform_1(%arg0: i32) -> (i32, i32) {
    %c0_i32 = arith.constant 0 : i32
    %c0_i32_0 = arith.constant 0 : i32
    %c0_i32_1 = arith.constant 0 : i32
    return %c0_i32, %c0_i32_0 : i32, i32
  }
  func.func @transform_2(%arg0: i32) -> (i32, i32) {
    %c0_i32 = arith.constant 0 : i32
    %c0_i32_0 = arith.constant 0 : i32
    %c0_i32_1 = arith.constant 0 : i32
    return %c0_i32, %c0_i32_0 : i32, i32
  }
  func.func @transform_3(%arg0: i32) -> (i32, i32) {
    %c0_i32 = arith.constant 0 : i32
    %c0_i32_0 = arith.constant 0 : i32
    %c0_i32_1 = arith.constant 0 : i32
    return %c0_i32, %c0_i32_0 : i32, i32
  }
  func.func @transform_4(%arg0: i32) -> (i32, i32) {
    %c0_i32 = arith.constant 0 : i32
    %c0_i32_0 = arith.constant 0 : i32
    %c0_i32_1 = arith.constant 0 : i32
    return %c0_i32, %c0_i32_0 : i32, i32
  }
  func.func @transform_5(%arg0: i32) -> (i32, i32) {
    %c0_i32 = arith.constant 0 : i32
    %c0_i32_0 = arith.constant 0 : i32
    %c0_i32_1 = arith.constant 0 : i32
    return %c0_i32, %c0_i32_0 : i32, i32
  }
  func.func @transform_6(%arg0: i32) -> (i32, i32) {
    %c0_i32 = arith.constant 0 : i32
    %c0_i32_0 = arith.constant 0 : i32
    %c0_i32_1 = arith.constant 0 : i32
    return %c0_i32, %c0_i32_0 : i32, i32
  }
  func.func @transform_7(%arg0: i32) -> (i32, i32) {
    %c0_i32 = arith.constant 0 : i32
    %c0_i32_0 = arith.constant 0 : i32
    %c0_i32_1 = arith.constant 0 : i32
    return %c0_i32, %c0_i32_0 : i32, i32
  }
  func.func @transform_8(%arg0: i32) -> (i32, i32) {
    %c0_i32 = arith.constant 0 : i32
    %c0_i32_0 = arith.constant 0 : i32
    %c0_i32_1 = arith.constant 0 : i32
    return %c0_i32, %c0_i32_0 : i32, i32
  }
  func.func @transform_9(%arg0: i32) -> (i32, i32) {
    %c0_i32 = arith.constant 0 : i32
    %c0_i32_0 = arith.constant 0 : i32
    return %arg0, %c0_i32 : i32, i32
  }
}

</mosaic_0001>

<llo_original>
// kernel: tpu_custom_call.1
$region0: #{tpu_custom_call.1}
  #allocation0 [shape = 'u32[]', space=smem, size = 0x4, offset = 0x4, fixed_abs, tag = 'smem constant byte address 0x4 - core index']
  #allocation1 [shape = 'u32[144,128]{1,0:T(1,128)}', space=vmem, size = 0x12000, scoped, tag = 'internal scratch']
  %s0 = inlined_call_operand.vmem [shape: f32[16,784], index: 0, kind: input, shape index: {}]
  %s1 = inlined_call_operand.vmem [shape: bf16[784,64], index: 1, kind: input, shape index: {}]
  %s2 = inlined_call_operand.vmem [shape: f32[1,64], index: 2, kind: input, shape index: {}]
  %s3 = inlined_call_operand.vmem [shape: bf16[64,64], index: 3, kind: input, shape index: {}]
  %s4 = inlined_call_operand.vmem [shape: f32[1,64], index: 4, kind: input, shape index: {}]
  %s5 = inlined_call_operand.vmem [shape: bf16[64,64], index: 5, kind: input, shape index: {}]
  %s6 = inlined_call_operand.vmem [shape: f32[1,64], index: 6, kind: input, shape index: {}]
  %s7 = inlined_call_operand.vmem [shape: bf16[64,10], index: 7, kind: input, shape index: {}]
  %s8 = inlined_call_operand.vmem [shape: f32[1,10], index: 8, kind: input, shape index: {}]
  %s9 = inlined_call_operand.hbm [shape: f32[16,10], index: 9, kind: output, shape index: {}]
  %s10 = sld [smem:[#allocation0]]
  $region46: #{tpu_custom_call.1} parent=0
    _
  %s12 = ssub.s32 1, %s10
  %s13 = scalar_select 0, %s12, %s10
  $region1: #{tpu_custom_call.1} parent=0
    #allocation2 [shape = 'u8[8192]{0}', space=vmem, size = 0x2000, scoped, tag = 'output window, operand 0, single buffered']
    #allocation3 [shape = 's32[1]{0}', space=sflag, size = 0x4, scoped, tag = 'scoped memory for tpu_custom_call.1']
    %14 = vsyncpa [#allocation3], 0
    // Predicated region
    $region2: #{tpu_custom_call.1} parent=1 // pred_check
      _
    $region3: #{tpu_custom_call.1} parent=1 // pred_check_branch
      %16 = sbr.rel (0) target = $region5
    $region4: #{tpu_custom_call.1} parent=1 // pred_region
      _
    $region5: #{tpu_custom_call.1} parent=1 // pred_fallthru
      _
    // Predicated region
    $region6: #{tpu_custom_call.1} parent=1 // pred_check
      _
    $region7: #{tpu_custom_call.1} parent=1 // pred_check_branch
      %18 = sbr.rel (0) target = $region9
    $region8: #{tpu_custom_call.1} parent=1 // pred_region
      _
    $region9: #{tpu_custom_call.1} parent=1 // pred_fallthru
      _
    // Predicated region
    $region10: #{tpu_custom_call.1} parent=1 // pred_check
      _
    $region11: #{tpu_custom_call.1} parent=1 // pred_check_branch
      %20 = sbr.rel (0) target = $region13
    $region12: #{tpu_custom_call.1} parent=1 // pred_region
      _
    $region13: #{tpu_custom_call.1} parent=1 // pred_fallthru
      _
    // Predicated region
    $region14: #{tpu_custom_call.1} parent=1 // pred_check
      _
    $region15: #{tpu_custom_call.1} parent=1 // pred_check_branch
      %22 = sbr.rel (0) target = $region17
    $region16: #{tpu_custom_call.1} parent=1 // pred_region
      _
    $region17: #{tpu_custom_call.1} parent=1 // pred_fallthru
      _
    // Predicated region
    $region18: #{tpu_custom_call.1} parent=1 // pred_check
      _
    $region19: #{tpu_custom_call.1} parent=1 // pred_check_branch
      %24 = sbr.rel (0) target = $region21
    $region20: #{tpu_custom_call.1} parent=1 // pred_region
      _
    $region21: #{tpu_custom_call.1} parent=1 // pred_fallthru
      _
    // Predicated region
    $region22: #{tpu_custom_call.1} parent=1 // pred_check
      _
    $region23: #{tpu_custom_call.1} parent=1 // pred_check_branch
      %26 = sbr.rel (0) target = $region25
    $region24: #{tpu_custom_call.1} parent=1 // pred_region
      _
    $region25: #{tpu_custom_call.1} parent=1 // pred_fallthru
      _
    // Predicated region
    $region26: #{tpu_custom_call.1} parent=1 // pred_check
      _
    $region27: #{tpu_custom_call.1} parent=1 // pred_check_branch
      %28 = sbr.rel (0) target = $region29
    $region28: #{tpu_custom_call.1} parent=1 // pred_region
      _
    $region29: #{tpu_custom_call.1} parent=1 // pred_fallthru
      _
    // Predicated region
    $region30: #{tpu_custom_call.1} parent=1 // pred_check
      _
    $region31: #{tpu_custom_call.1} parent=1 // pred_check_branch
      %30 = sbr.rel (0) target = $region33
    $region32: #{tpu_custom_call.1} parent=1 // pred_region
      _
    $region33: #{tpu_custom_call.1} parent=1 // pred_fallthru
      _
    // Predicated region
    $region34: #{tpu_custom_call.1} parent=1 // pred_check
      _
    $region35: #{tpu_custom_call.1} parent=1 // pred_check_branch
      %32 = sbr.rel (0) target = $region37
    $region36: #{tpu_custom_call.1} parent=1 // pred_region
      _
    $region37: #{tpu_custom_call.1} parent=1 // pred_fallthru
      _
    %v34 = vld [vmem:[%s0] sm:$0xff]
    %v35 = vld [vmem:[%s0 + $0x8] sm:$0xff]
    %v36 = vld [vmem:[%s0 + $0x10] sm:$0xff]
    %v37 = vld [vmem:[%s0 + $0x18] sm:$0xff]
    %v38 = vld [vmem:[%s0 + $0x20] sm:$0xff]
    %v39 = vld [vmem:[%s0 + $0x28] sm:$0xff]
    %v40 = vld [vmem:[%s0 + $0x30] sm:$0xff]
    %v41 = vld [vmem:[%s0 + $0x38] sm:$0xff]
    %v42 = vld [vmem:[%s0 + $0x40] sm:$0xff]
    %v43 = vld [vmem:[%s0 + $0x48] sm:$0xff]
    %v44 = vld [vmem:[%s0 + $0x50] sm:$0xff]
    %v45 = vld [vmem:[%s0 + $0x58] sm:$0xff]
    %v46 = vld [vmem:[%s0 + $0x60] sm:$0xff]
    %v47 = vld [vmem:[%s0 + $0x68] sm:$0xff]
    %v48 = vpack.c.bf16 %v41, %v34
    %v49 = vpack.c.bf16 %v42, %v35
    %v50 = vpack.c.bf16 %v43, %v36
    %v51 = vpack.c.bf16 %v44, %v37
    %v52 = vpack.c.bf16 %v45, %v38
    %v53 = vpack.c.bf16 %v46, %v39
    %v54 = vpack.c.bf16 %v47, %v40
    %v55 = vld [vmem:[%s1] sm:$0xf]
    %v56 = vld [vmem:[%s1 + $0x4] sm:$0xf]
    %v57 = vld [vmem:[%s1 + $0x8] sm:$0xf]
    %v58 = vld [vmem:[%s1 + $0xc] sm:$0xf]
    %v59 = vld [vmem:[%s1 + $0x10] sm:$0xf]
    %v60 = vld [vmem:[%s1 + $0x14] sm:$0xf]
    %v61 = vld [vmem:[%s1 + $0x18] sm:$0xf]
    %v62 = vld [vmem:[%s1 + $0x1c] sm:$0xf]
    %v63 = vld [vmem:[%s1 + $0x20] sm:$0xf]
    %v64 = vld [vmem:[%s1 + $0x24] sm:$0xf]
    %v65 = vld [vmem:[%s1 + $0x28] sm:$0xf]
    %v66 = vld [vmem:[%s1 + $0x2c] sm:$0xf]
    %v67 = vld [vmem:[%s1 + $0x30] sm:$0xf]
    %v68 = vld [vmem:[%s1 + $0x34] sm:$0xf]
    %v69 = vld [vmem:[%s1 + $0x38] sm:$0xf]
    %v70 = vld [vmem:[%s1 + $0x3c] sm:$0xf]
    %v71 = vld [vmem:[%s1 + $0x40] sm:$0xf]
    %v72 = vld [vmem:[%s1 + $0x44] sm:$0xf]
    %v73 = vld [vmem:[%s1 + $0x48] sm:$0xf]
    %v74 = vld [vmem:[%s1 + $0x4c] sm:$0xf]
    %v75 = vld [vmem:[%s1 + $0x50] sm:$0xf]
    %v76 = vld [vmem:[%s1 + $0x54] sm:$0xf]
    %v77 = vld [vmem:[%s1 + $0x58] sm:$0xf]
    %v78 = vld [vmem:[%s1 + $0x5c] sm:$0xf]
    %v79 = vld [vmem:[%s1 + $0x60] sm:$0xf]
    %v80 = vld [vmem:[%s1 + $0x64] sm:$0xf]
    %v81 = vld [vmem:[%s1 + $0x68] sm:$0xf]
    %v82 = vld [vmem:[%s1 + $0x6c] sm:$0xf]
    %v83 = vld [vmem:[%s1 + $0x70] sm:$0xf]
    %v84 = vld [vmem:[%s1 + $0x74] sm:$0xf]
    %v85 = vld [vmem:[%s1 + $0x78] sm:$0xf]
    %v86 = vld [vmem:[%s1 + $0x7c] sm:$0xf]
    %v87 = vld [vmem:[%s1 + $0x80] sm:$0xf]
    %v88 = vld [vmem:[%s1 + $0x84] sm:$0xf]
    %v89 = vld [vmem:[%s1 + $0x88] sm:$0xf]
    %v90 = vld [vmem:[%s1 + $0x8c] sm:$0xf]
    %v91 = vld [vmem:[%s1 + $0x90] sm:$0xf]
    %v92 = vld [vmem:[%s1 + $0x94] sm:$0xf]
    %v93 = vld [vmem:[%s1 + $0x98] sm:$0xf]
    %v94 = vld [vmem:[%s1 + $0x9c] sm:$0xf]
    %v95 = vld [vmem:[%s1 + $0xa0] sm:$0xf]
    %v96 = vld [vmem:[%s1 + $0xa4] sm:$0xf]
    %v97 = vld [vmem:[%s1 + $0xa8] sm:$0xf]
    %v98 = vld [vmem:[%s1 + $0xac] sm:$0xf]
    %v99 = vld [vmem:[%s1 + $0xb0] sm:$0xf]
    %v100 = vld [vmem:[%s1 + $0xb4] sm:$0xf]
    %v101 = vld [vmem:[%s1 + $0xb8] sm:$0xf]
    %v102 = vld [vmem:[%s1 + $0xbc] sm:$0xf]
    %v103 = vld [vmem:[%s1 + $0xc0] sm:$0xf]
    %v104 = vld [vmem:[%s1 + $0xc4] sm:$0xf]
    %v105 = vld [vmem:[%s1 + $0xc8] sm:$0xf]
    %v106 = vld [vmem:[%s1 + $0xcc] sm:$0xf]
    %v107 = vld [vmem:[%s1 + $0xd0] sm:$0xf]
    %v108 = vld [vmem:[%s1 + $0xd4] sm:$0xf]
    %v109 = vld [vmem:[%s1 + $0xd8] sm:$0xf]
    %v110 = vld [vmem:[%s1 + $0xdc] sm:$0xf]
    %v111 = vld [vmem:[%s1 + $0xe0] sm:$0xf]
    %v112 = vld [vmem:[%s1 + $0xe4] sm:$0xf]
    %v113 = vld [vmem:[%s1 + $0xe8] sm:$0xf]
    %v114 = vld [vmem:[%s1 + $0xec] sm:$0xf]
    %v115 = vld [vmem:[%s1 + $0xf0] sm:$0xf]
    %v116 = vld [vmem:[%s1 + $0xf4] sm:$0xf]
    %v117 = vld [vmem:[%s1 + $0xf8] sm:$0xf]
    %v118 = vld [vmem:[%s1 + $0xfc] sm:$0xf]
    %v119 = vld [vmem:[%s1 + $0x100] sm:$0xf]
    %v120 = vld [vmem:[%s1 + $0x104] sm:$0xf]
    %v121 = vld [vmem:[%s1 + $0x108] sm:$0xf]
    %v122 = vld [vmem:[%s1 + $0x10c] sm:$0xf]
    %v123 = vld [vmem:[%s1 + $0x110] sm:$0xf]
    %v124 = vld [vmem:[%s1 + $0x114] sm:$0xf]
    %v125 = vld [vmem:[%s1 + $0x118] sm:$0xf]
    %v126 = vld [vmem:[%s1 + $0x11c] sm:$0xf]
    %v127 = vld [vmem:[%s1 + $0x120] sm:$0xf]
    %v128 = vld [vmem:[%s1 + $0x124] sm:$0xf]
    %v129 = vld [vmem:[%s1 + $0x128] sm:$0xf]
    %v130 = vld [vmem:[%s1 + $0x12c] sm:$0xf]
    %v131 = vld [vmem:[%s1 + $0x130] sm:$0xf]
    %v132 = vld [vmem:[%s1 + $0x134] sm:$0xf]
    %v133 = vld [vmem:[%s1 + $0x138] sm:$0xf]
    %v134 = vld [vmem:[%s1 + $0x13c] sm:$0xf]
    %v135 = vld [vmem:[%s1 + $0x140] sm:$0xf]
    %v136 = vld [vmem:[%s1 + $0x144] sm:$0xf]
    %v137 = vld [vmem:[%s1 + $0x148] sm:$0xf]
    %v138 = vld [vmem:[%s1 + $0x14c] sm:$0xf]
    %v139 = vld [vmem:[%s1 + $0x150] sm:$0xf]
    %v140 = vld [vmem:[%s1 + $0x154] sm:$0xf]
    %v141 = vld [vmem:[%s1 + $0x158] sm:$0xf]
    %v142 = vld [vmem:[%s1 + $0x15c] sm:$0xf]
    %v143 = vld [vmem:[%s1 + $0x160] sm:$0xf]
    %v144 = vld [vmem:[%s1 + $0x164] sm:$0xf]
    %v145 = vld [vmem:[%s1 + $0x168] sm:$0xf]
    %v146 = vld [vmem:[%s1 + $0x16c] sm:$0xf]
    %v147 = vld [vmem:[%s1 + $0x170] sm:$0xf]
    %v148 = vld [vmem:[%s1 + $0x174] sm:$0xf]
    %v149 = vld [vmem:[%s1 + $0x178] sm:$0xf]
    %v150 = vld [vmem:[%s1 + $0x17c] sm:$0xf]
    %v151 = vld [vmem:[%s1 + $0x180] sm:$0xf]
    %v152 = vld [vmem:[%s1 + $0x184] sm:$0xf]
    %v153 = vld [vmem:[%s2] sm:$0x1]
    %v155 = vlaneseq
    %v156 = vshrl.u32 %v155, 7
    %v157 = vsub.s32 0, %v156
    %v158 = vrot.slane %v153, %v157
    %v258 = vunpack.c.l.b16 %v55
    %v259 = vunpack.c.l.b16 %v56
    %v260 = vunpack.c.l.b16 %v57
    %v261 = vunpack.c.l.b16 %v58
    %v262 = vunpack.c.l.b16 %v59
    %v263 = vunpack.c.l.b16 %v60
    %v264 = vunpack.c.l.b16 %v61
    %v265 = vunpack.c.l.b16 %v62
    %v266 = vunpack.c.l.b16 %v63
    %v267 = vunpack.c.l.b16 %v64
    %v268 = vunpack.c.l.b16 %v65
    %v269 = vunpack.c.l.b16 %v66
    %v270 = vunpack.c.l.b16 %v67
    %v271 = vunpack.c.l.b16 %v68
    %v272 = vunpack.c.l.b16 %v69
    %v273 = vunpack.c.l.b16 %v70
    %v274 = vunpack.c.l.b16 %v71
    %v275 = vunpack.c.l.b16 %v72
    %v276 = vunpack.c.l.b16 %v73
    %v277 = vunpack.c.l.b16 %v74
    %v278 = vunpack.c.l.b16 %v75
    %v279 = vunpack.c.l.b16 %v76
    %v280 = vunpack.c.l.b16 %v77
    %v281 = vunpack.c.l.b16 %v78
    %v282 = vunpack.c.l.b16 %v79
    %v283 = vunpack.c.l.b16 %v80
    %v284 = vunpack.c.l.b16 %v81
    %v285 = vunpack.c.l.b16 %v82
    %v286 = vunpack.c.l.b16 %v83
    %v287 = vunpack.c.l.b16 %v84
    %v288 = vunpack.c.l.b16 %v85
    %v289 = vunpack.c.l.b16 %v86
    %v290 = vunpack.c.l.b16 %v87
    %v291 = vunpack.c.l.b16 %v88
    %v292 = vunpack.c.l.b16 %v89
    %v293 = vunpack.c.l.b16 %v90
    %v294 = vunpack.c.l.b16 %v91
    %v295 = vunpack.c.l.b16 %v92
    %v296 = vunpack.c.l.b16 %v93
    %v297 = vunpack.c.l.b16 %v94
    %v298 = vunpack.c.l.b16 %v95
    %v299 = vunpack.c.l.b16 %v96
    %v300 = vunpack.c.l.b16 %v97
    %v301 = vunpack.c.l.b16 %v98
    %v302 = vunpack.c.l.b16 %v99
    %v303 = vunpack.c.l.b16 %v100
    %v304 = vunpack.c.l.b16 %v101
    %v305 = vunpack.c.l.b16 %v102
    %v306 = vunpack.c.l.b16 %v103
    %v307 = vunpack.c.l.b16 %v104
    %v308 = vunpack.c.l.b16 %v105
    %v309 = vunpack.c.l.b16 %v106
    %v310 = vunpack.c.l.b16 %v107
    %v311 = vunpack.c.l.b16 %v108
    %v312 = vunpack.c.l.b16 %v109
    %v313 = vunpack.c.l.b16 %v110
    %v314 = vunpack.c.l.b16 %v111
    %v315 = vunpack.c.l.b16 %v112
    %v316 = vunpack.c.l.b16 %v113
    %v317 = vunpack.c.l.b16 %v114
    %v318 = vunpack.c.l.b16 %v115
    %v319 = vunpack.c.l.b16 %v116
    %v320 = vunpack.c.l.b16 %v117
    %v321 = vunpack.c.l.b16 %v118
    %v322 = vunpack.c.l.b16 %v119
    %v323 = vunpack.c.l.b16 %v120
    %v324 = vunpack.c.l.b16 %v121
    %v325 = vunpack.c.l.b16 %v122
    %v326 = vunpack.c.l.b16 %v123
    %v327 = vunpack.c.l.b16 %v124
    %v328 = vunpack.c.l.b16 %v125
    %v329 = vunpack.c.l.b16 %v126
    %v330 = vunpack.c.l.b16 %v127
    %v331 = vunpack.c.l.b16 %v128
    %v332 = vunpack.c.l.b16 %v129
    %v333 = vunpack.c.l.b16 %v130
    %v334 = vunpack.c.l.b16 %v131
    %v335 = vunpack.c.l.b16 %v132
    %v336 = vunpack.c.l.b16 %v133
    %v337 = vunpack.c.l.b16 %v134
    %v338 = vunpack.c.l.b16 %v135
    %v339 = vunpack.c.l.b16 %v136
    %v340 = vunpack.c.l.b16 %v137
    %v341 = vunpack.c.l.b16 %v138
    %v342 = vunpack.c.l.b16 %v139
    %v343 = vunpack.c.l.b16 %v140
    %v344 = vunpack.c.l.b16 %v141
    %v345 = vunpack.c.l.b16 %v142
    %v346 = vunpack.c.l.b16 %v143
    %v347 = vunpack.c.l.b16 %v144
    %v348 = vunpack.c.l.b16 %v145
    %v349 = vunpack.c.l.b16 %v146
    %v350 = vunpack.c.l.b16 %v147
    %v351 = vunpack.c.l.b16 %v148
    %v352 = vunpack.c.l.b16 %v149
    %v353 = vunpack.c.l.b16 %v150
    %v354 = vunpack.c.l.b16 %v151
    %v355 = vunpack.c.l.b16 %v152
    %v356 = vpack.c.b16 %v259, %v258
    %v357 = vpack.c.b16 %v261, %v260
    %v358 = vpack.c.b16 %v263, %v262
    %v359 = vpack.c.b16 %v265, %v264
    %v360 = vpack.c.b16 %v267, %v266
    %v361 = vpack.c.b16 %v269, %v268
    %v362 = vpack.c.b16 %v271, %v270
    %v363 = vpack.c.b16 %v273, %v272
    %v364 = vpack.c.b16 %v275, %v274
    %v365 = vpack.c.b16 %v277, %v276
    %v366 = vpack.c.b16 %v279, %v278
    %v367 = vpack.c.b16 %v281, %v280
    %v368 = vpack.c.b16 %v283, %v282
    %v369 = vpack.c.b16 %v285, %v284
    %v370 = vpack.c.b16 %v287, %v286
    %v371 = vpack.c.b16 %v289, %v288
    %v372 = vpack.c.b16 %v291, %v290
    %v373 = vpack.c.b16 %v293, %v292
    %v374 = vpack.c.b16 %v295, %v294
    %v375 = vpack.c.b16 %v297, %v296
    %v376 = vpack.c.b16 %v299, %v298
    %v377 = vpack.c.b16 %v301, %v300
    %v378 = vpack.c.b16 %v303, %v302
    %v379 = vpack.c.b16 %v305, %v304
    %v380 = vpack.c.b16 %v307, %v306
    %v381 = vpack.c.b16 %v309, %v308
    %v382 = vpack.c.b16 %v311, %v310
    %v383 = vpack.c.b16 %v313, %v312
    %v384 = vpack.c.b16 %v315, %v314
    %v385 = vpack.c.b16 %v317, %v316
    %v386 = vpack.c.b16 %v319, %v318
    %v387 = vpack.c.b16 %v321, %v320
    %v388 = vpack.c.b16 %v323, %v322
    %v389 = vpack.c.b16 %v325, %v324
    %v390 = vpack.c.b16 %v327, %v326
    %v391 = vpack.c.b16 %v329, %v328
    %v392 = vpack.c.b16 %v331, %v330
    %v393 = vpack.c.b16 %v333, %v332
    %v394 = vpack.c.b16 %v335, %v334
    %v395 = vpack.c.b16 %v337, %v336
    %v396 = vpack.c.b16 %v339, %v338
    %v397 = vpack.c.b16 %v341, %v340
    %v398 = vpack.c.b16 %v343, %v342
    %v399 = vpack.c.b16 %v345, %v344
    %v400 = vpack.c.b16 %v347, %v346
    %v401 = vpack.c.b16 %v349, %v348
    %v402 = vpack.c.b16 %v351, %v350
    %v403 = vpack.c.b16 %v353, %v352
    %v404 = vpack.c.b16 %v355, %v354
    %vm454 = vcmask 130048
    %v456 = vsel %vm454, %v54, 0
    %458 = vmatprep.subr.bf16.mxu0 0
    %459 = vmatpush1.bf16.msra.mxu0 %v363
    %460 = vmatprep.subr.bf16.mxu0 0
    %461 = vmatpush1.bf16.msra.mxu0 %v362
    %462 = vmatprep.subr.bf16.mxu0 0
    %463 = vmatpush1.bf16.msra.mxu0 %v361
    %464 = vmatprep.subr.bf16.mxu0 0
    %465 = vmatpush1.bf16.msra.mxu0 %v360
    %466 = vmatprep.subr.bf16.mxu0 0
    %467 = vmatpush1.bf16.msra.mxu0 %v359
    %468 = vmatprep.subr.bf16.mxu0 0
    %469 = vmatpush1.bf16.msra.mxu0 %v358
    %470 = vmatprep.subr.bf16.mxu0 0
    %471 = vmatpush1.bf16.msra.mxu0 %v357
    %472 = vmatprep.subr.bf16.mxu0 0
    %473 = vmatpush1.bf16.msra.mxu0 %v356
    %474 = vmatprep.subr.bf16.mxu0 0
    %475 = vmatpush2.bf16.msra.mxu0 %v371
    %476 = vmatprep.subr.bf16.mxu0 0
    %477 = vmatpush2.bf16.msra.mxu0 %v370
    %478 = vmatprep.subr.bf16.mxu0 0
    %479 = vmatpush2.bf16.msra.mxu0 %v369
    %480 = vmatprep.subr.bf16.mxu0 0
    %481 = vmatpush2.bf16.msra.mxu0 %v368
    %482 = vmatprep.subr.bf16.mxu0 0
    %483 = vmatpush2.bf16.msra.mxu0 %v367
    %484 = vmatprep.subr.bf16.mxu0 0
    %485 = vmatpush2.bf16.msra.mxu0 %v366
    %486 = vmatprep.subr.bf16.mxu0 0
    %487 = vmatpush2.bf16.msra.mxu0 %v365
    %488 = vmatprep.subr.bf16.mxu0 0
    %489 = vmatpush2.bf16.msra.mxu0 %v364
    %490 = vmatprep.mubr.bf16.mxu0 %v49
    %491 = vmatmul.mubr.bf16.gmra.mxu0 %v48
    %v492 = vpop.f32.mrf.mxu0
    %v493 = vadd.f32 %v158, %v492
    %v494 = vpop.f32.mrf.mxu0
    %v495 = vpop.f32.mrf.mxu0
    %v496 = vadd.f32 %v158, %v495
    %v497 = vpop.f32.mrf.mxu0
    %498 = vdwg.mxu0
    %499 = vmatprep.subr.bf16.mxu0 0
    %500 = vmatpush1.bf16.msra.mxu0 %v379
    %501 = vmatprep.subr.bf16.mxu0 0
    %502 = vmatpush1.bf16.msra.mxu0 %v378
    %503 = vmatprep.subr.bf16.mxu0 0
    %504 = vmatpush1.bf16.msra.mxu0 %v377
    %505 = vmatprep.subr.bf16.mxu0 0
    %506 = vmatpush1.bf16.msra.mxu0 %v376
    %507 = vmatprep.subr.bf16.mxu0 0
    %508 = vmatpush1.bf16.msra.mxu0 %v375
    %509 = vmatprep.subr.bf16.mxu0 0
    %510 = vmatpush1.bf16.msra.mxu0 %v374
    %511 = vmatprep.subr.bf16.mxu0 0
    %512 = vmatpush1.bf16.msra.mxu0 %v373
    %513 = vmatprep.subr.bf16.mxu0 0
    %514 = vmatpush1.bf16.msra.mxu0 %v372
    %515 = vmatprep.subr.bf16.mxu0 0
    %516 = vmatpush2.bf16.msra.mxu0 %v387
    %517 = vmatprep.subr.bf16.mxu0 0
    %518 = vmatpush2.bf16.msra.mxu0 %v386
    %519 = vmatprep.subr.bf16.mxu0 0
    %520 = vmatpush2.bf16.msra.mxu0 %v385
    %521 = vmatprep.subr.bf16.mxu0 0
    %522 = vmatpush2.bf16.msra.mxu0 %v384
    %523 = vmatprep.subr.bf16.mxu0 0
    %524 = vmatpush2.bf16.msra.mxu0 %v383
    %525 = vmatprep.subr.bf16.mxu0 0
    %526 = vmatpush2.bf16.msra.mxu0 %v382
    %527 = vmatprep.subr.bf16.mxu0 0
    %528 = vmatpush2.bf16.msra.mxu0 %v381
    %529 = vmatprep.subr.bf16.mxu0 0
    %530 = vmatpush2.bf16.msra.mxu0 %v380
    %531 = vmatprep.mubr.bf16.mxu0 %v51
    %532 = vmatmul.mubr.bf16.gmra.mxu0 %v50
    %v533 = vpop.f32.mrf.mxu0
    %v534 = vadd.f32 %v493, %v533
    %v535 = vpop.f32.mrf.mxu0
    %v536 = vpop.f32.mrf.mxu0
    %v537 = vadd.f32 %v496, %v536
    %v538 = vpop.f32.mrf.mxu0
    %539 = vdwg.mxu0
    %540 = vmatprep.subr.bf16.mxu0 0
    %541 = vmatpush1.bf16.msra.mxu0 %v395
    %542 = vmatprep.subr.bf16.mxu0 0
    %543 = vmatpush1.bf16.msra.mxu0 %v394
    %544 = vmatprep.subr.bf16.mxu0 0
    %545 = vmatpush1.bf16.msra.mxu0 %v393
    %546 = vmatprep.subr.bf16.mxu0 0
    %547 = vmatpush1.bf16.msra.mxu0 %v392
    %548 = vmatprep.subr.bf16.mxu0 0
    %549 = vmatpush1.bf16.msra.mxu0 %v391
    %550 = vmatprep.subr.bf16.mxu0 0
    %551 = vmatpush1.bf16.msra.mxu0 %v390
    %552 = vmatprep.subr.bf16.mxu0 0
    %553 = vmatpush1.bf16.msra.mxu0 %v389
    %554 = vmatprep.subr.bf16.mxu0 0
    %555 = vmatpush1.bf16.msra.mxu0 %v388
    %556 = vmatprep.subr.bf16.mxu0 0
    %557 = vmatpush2.bf16.msra.mxu0 %v403
    %558 = vmatprep.subr.bf16.mxu0 0
    %559 = vmatpush2.bf16.msra.mxu0 %v402
    %560 = vmatprep.subr.bf16.mxu0 0
    %561 = vmatpush2.bf16.msra.mxu0 %v401
    %562 = vmatprep.subr.bf16.mxu0 0
    %563 = vmatpush2.bf16.msra.mxu0 %v400
    %564 = vmatprep.subr.bf16.mxu0 0
    %565 = vmatpush2.bf16.msra.mxu0 %v399
    %566 = vmatprep.subr.bf16.mxu0 0
    %567 = vmatpush2.bf16.msra.mxu0 %v398
    %568 = vmatprep.subr.bf16.mxu0 0
    %569 = vmatpush2.bf16.msra.mxu0 %v397
    %570 = vmatprep.subr.bf16.mxu0 0
    %571 = vmatpush2.bf16.msra.mxu0 %v396
    %572 = vmatprep.mubr.bf16.mxu0 %v53
    %573 = vmatmul.mubr.bf16.gmra.mxu0 %v52
    %v574 = vpop.f32.mrf.mxu0
    %v575 = vadd.f32 %v534, %v574
    %v576 = vpop.f32.mrf.mxu0
    %v577 = vpop.f32.mrf.mxu0
    %v578 = vadd.f32 %v537, %v577
    %v579 = vpop.f32.mrf.mxu0
    %580 = vdwg.mxu0
    %581 = vmatprep.subr.bf16.mxu0 0
    %582 = vmatpush1.bf16.msra.mxu0 0
    %583 = vmatprep.subr.bf16.mxu0 0
    %584 = vmatpush1.bf16.msra.mxu0 0
    %585 = vmatprep.subr.bf16.mxu0 0
    %586 = vmatpush1.bf16.msra.mxu0 0
    %587 = vmatprep.subr.bf16.mxu0 0
    %588 = vmatpush1.bf16.msra.mxu0 0
    %589 = vmatprep.subr.bf16.mxu0 0
    %590 = vmatpush1.bf16.msra.mxu0 0
    %591 = vmatprep.subr.bf16.mxu0 0
    %592 = vmatpush1.bf16.msra.mxu0 0
    %593 = vmatprep.subr.bf16.mxu0 0
    %594 = vmatpush1.bf16.msra.mxu0 0
    %595 = vmatprep.subr.bf16.mxu0 0
    %596 = vmatpush1.bf16.msra.mxu0 %v404
    %597 = vmatprep.subr.bf16.mxu0 0
    %598 = vmatpush2.bf16.msra.mxu0 0
    %599 = vmatprep.subr.bf16.mxu0 0
    %600 = vmatpush2.bf16.msra.mxu0 0
    %601 = vmatprep.subr.bf16.mxu0 0
    %602 = vmatpush2.bf16.msra.mxu0 0
    %603 = vmatprep.subr.bf16.mxu0 0
    %604 = vmatpush2.bf16.msra.mxu0 0
    %605 = vmatprep.subr.bf16.mxu0 0
    %606 = vmatpush2.bf16.msra.mxu0 0
    %607 = vmatprep.subr.bf16.mxu0 0
    %608 = vmatpush2.bf16.msra.mxu0 0
    %609 = vmatprep.subr.bf16.mxu0 0
    %610 = vmatpush2.bf16.msra.mxu0 0
    %611 = vmatprep.subr.bf16.mxu0 0
    %612 = vmatpush2.bf16.msra.mxu0 0
    %613 = vmatprep.mubr.bf16.mxu0 0
    %614 = vmatmul.mubr.bf16.gmra.mxu0 %v456
    %v615 = vpop.f32.mrf.mxu0
    %v616 = vadd.f32 %v575, %v615
    %v617 = vpop.f32.mrf.mxu0
    %v618 = vpop.f32.mrf.mxu0
    %v619 = vadd.f32 %v578, %v618
    %v620 = vpop.f32.mrf.mxu0
    %621 = vdwg.mxu0
    %v622 = vmax.f32 %v616, 0.0
    %v623 = vmax.f32 %v619, 0.0
    %v624 = vpack.c.bf16 %v623, %v622
    %v625 = vld [vmem:[%s3] sm:$0xf]
    %v626 = vld [vmem:[%s3 + $0x4] sm:$0xf]
    %v627 = vld [vmem:[%s3 + $0x8] sm:$0xf]
    %v628 = vld [vmem:[%s3 + $0xc] sm:$0xf]
    %v629 = vld [vmem:[%s3 + $0x10] sm:$0xf]
    %v630 = vld [vmem:[%s3 + $0x14] sm:$0xf]
    %v631 = vld [vmem:[%s3 + $0x18] sm:$0xf]
    %v632 = vld [vmem:[%s3 + $0x1c] sm:$0xf]
    %v633 = vld [vmem:[%s4] sm:$0x1]
    %v635 = vlaneseq
    %v636 = vshrl.u32 %v635, 7
    %v637 = vsub.s32 0, %v636
    %v638 = vrot.slane %v633, %v637
    %v648 = vunpack.c.l.b16 %v625
    %v649 = vunpack.c.l.b16 %v626
    %v650 = vunpack.c.l.b16 %v627
    %v651 = vunpack.c.l.b16 %v628
    %v652 = vunpack.c.l.b16 %v629
    %v653 = vunpack.c.l.b16 %v630
    %v654 = vunpack.c.l.b16 %v631
    %v655 = vunpack.c.l.b16 %v632
    %v656 = vpack.c.b16 %v649, %v648
    %v657 = vpack.c.b16 %v651, %v650
    %v658 = vpack.c.b16 %v653, %v652
    %v659 = vpack.c.b16 %v655, %v654
    %vm664 = vcmask 523264
    %v666 = vsel %vm664, %v624, 0
    %668 = vmatprep.subr.bf16.mxu0 0
    %669 = vmatpush1.bf16.msra.mxu0 0
    %670 = vmatprep.subr.bf16.mxu0 0
    %671 = vmatpush1.bf16.msra.mxu0 0
    %672 = vmatprep.subr.bf16.mxu0 0
    %673 = vmatpush1.bf16.msra.mxu0 0
    %674 = vmatprep.subr.bf16.mxu0 0
    %675 = vmatpush1.bf16.msra.mxu0 0
    %676 = vmatprep.subr.bf16.mxu0 0
    %677 = vmatpush1.bf16.msra.mxu0 %v659
    %678 = vmatprep.subr.bf16.mxu0 0
    %679 = vmatpush1.bf16.msra.mxu0 %v658
    %680 = vmatprep.subr.bf16.mxu0 0
    %681 = vmatpush1.bf16.msra.mxu0 %v657
    %682 = vmatprep.subr.bf16.mxu0 0
    %683 = vmatpush1.bf16.msra.mxu0 %v656
    %684 = vmatprep.subr.bf16.mxu0 0
    %685 = vmatpush2.bf16.msra.mxu0 0
    %686 = vmatprep.subr.bf16.mxu0 0
    %687 = vmatpush2.bf16.msra.mxu0 0
    %688 = vmatprep.subr.bf16.mxu0 0
    %689 = vmatpush2.bf16.msra.mxu0 0
    %690 = vmatprep.subr.bf16.mxu0 0
    %691 = vmatpush2.bf16.msra.mxu0 0
    %692 = vmatprep.subr.bf16.mxu0 0
    %693 = vmatpush2.bf16.msra.mxu0 0
    %694 = vmatprep.subr.bf16.mxu0 0
    %695 = vmatpush2.bf16.msra.mxu0 0
    %696 = vmatprep.subr.bf16.mxu0 0
    %697 = vmatpush2.bf16.msra.mxu0 0
    %698 = vmatprep.subr.bf16.mxu0 0
    %699 = vmatpush2.bf16.msra.mxu0 0
    %700 = vmatprep.mubr.bf16.mxu0 0
    %701 = vmatmul.mubr.bf16.gmra.mxu0 %v666
    %v702 = vpop.f32.mrf.mxu0
    %v703 = vadd.f32 %v638, %v702
    %v704 = vpop.f32.mrf.mxu0
    %v705 = vpop.f32.mrf.mxu0
    %v706 = vadd.f32 %v638, %v705
    %v707 = vpop.f32.mrf.mxu0
    %708 = vdwg.mxu0
    %v709 = vmax.f32 %v703, 0.0
    %v710 = vmax.f32 %v706, 0.0
    %v711 = vpack.c.bf16 %v710, %v709
    %v712 = vld [vmem:[%s5] sm:$0xf]
    %v713 = vld [vmem:[%s5 + $0x4] sm:$0xf]
    %v714 = vld [vmem:[%s5 + $0x8] sm:$0xf]
    %v715 = vld [vmem:[%s5 + $0xc] sm:$0xf]
    %v716 = vld [vmem:[%s5 + $0x10] sm:$0xf]
    %v717 = vld [vmem:[%s5 + $0x14] sm:$0xf]
    %v718 = vld [vmem:[%s5 + $0x18] sm:$0xf]
    %v719 = vld [vmem:[%s5 + $0x1c] sm:$0xf]
    %v720 = vld [vmem:[%s6] sm:$0x1]
    %v722 = vlaneseq
    %v723 = vshrl.u32 %v722, 7
    %v724 = vsub.s32 0, %v723
    %v725 = vrot.slane %v720, %v724
    %v735 = vunpack.c.l.b16 %v712
    %v736 = vunpack.c.l.b16 %v713
    %v737 = vunpack.c.l.b16 %v714
    %v738 = vunpack.c.l.b16 %v715
    %v739 = vunpack.c.l.b16 %v716
    %v740 = vunpack.c.l.b16 %v717
    %v741 = vunpack.c.l.b16 %v718
    %v742 = vunpack.c.l.b16 %v719
    %v743 = vpack.c.b16 %v736, %v735
    %v744 = vpack.c.b16 %v738, %v737
    %v745 = vpack.c.b16 %v740, %v739
    %v746 = vpack.c.b16 %v742, %v741
    %v752 = vsel %vm664, %v711, 0
    %754 = vmatprep.subr.bf16.mxu0 0
    %755 = vmatpush1.bf16.msra.mxu0 0
    %756 = vmatprep.subr.bf16.mxu0 0
    %757 = vmatpush1.bf16.msra.mxu0 0
    %758 = vmatprep.subr.bf16.mxu0 0
    %759 = vmatpush1.bf16.msra.mxu0 0
    %760 = vmatprep.subr.bf16.mxu0 0
    %761 = vmatpush1.bf16.msra.mxu0 0
    %762 = vmatprep.subr.bf16.mxu0 0
    %763 = vmatpush1.bf16.msra.mxu0 %v746
    %764 = vmatprep.subr.bf16.mxu0 0
    %765 = vmatpush1.bf16.msra.mxu0 %v745
    %766 = vmatprep.subr.bf16.mxu0 0
    %767 = vmatpush1.bf16.msra.mxu0 %v744
    %768 = vmatprep.subr.bf16.mxu0 0
    %769 = vmatpush1.bf16.msra.mxu0 %v743
    %770 = vmatprep.subr.bf16.mxu0 0
    %771 = vmatpush2.bf16.msra.mxu0 0
    %772 = vmatprep.subr.bf16.mxu0 0
    %773 = vmatpush2.bf16.msra.mxu0 0
    %774 = vmatprep.subr.bf16.mxu0 0
    %775 = vmatpush2.bf16.msra.mxu0 0
    %776 = vmatprep.subr.bf16.mxu0 0
    %777 = vmatpush2.bf16.msra.mxu0 0
    %778 = vmatprep.subr.bf16.mxu0 0
    %779 = vmatpush2.bf16.msra.mxu0 0
    %780 = vmatprep.subr.bf16.mxu0 0
    %781 = vmatpush2.bf16.msra.mxu0 0
    %782 = vmatprep.subr.bf16.mxu0 0
    %783 = vmatpush2.bf16.msra.mxu0 0
    %784 = vmatprep.subr.bf16.mxu0 0
    %785 = vmatpush2.bf16.msra.mxu0 0
    %786 = vmatprep.mubr.bf16.mxu0 0
    %787 = vmatmul.mubr.bf16.gmra.mxu0 %v752
    %v788 = vpop.f32.mrf.mxu0
    %v789 = vadd.f32 %v725, %v788
    %v790 = vpop.f32.mrf.mxu0
    %v791 = vpop.f32.mrf.mxu0
    %v792 = vadd.f32 %v725, %v791
    %v793 = vpop.f32.mrf.mxu0
    %794 = vdwg.mxu0
    %v795 = vmax.f32 %v789, 0.0
    %v796 = vmax.f32 %v792, 0.0
    %v797 = vpack.c.bf16 %v796, %v795
    %v798 = vld [vmem:[%s7] sm:$0xf]
    %v799 = vld [vmem:[%s7 + $0x4] sm:$0xf]
    %v800 = vld [vmem:[%s7 + $0x8] sm:$0xf]
    %v801 = vld [vmem:[%s7 + $0xc] sm:$0xf]
    %v802 = vld [vmem:[%s7 + $0x10] sm:$0xf]
    %v803 = vld [vmem:[%s7 + $0x14] sm:$0xf]
    %v804 = vld [vmem:[%s7 + $0x18] sm:$0xf]
    %v805 = vld [vmem:[%s7 + $0x1c] sm:$0xf]
    %v806 = vld [vmem:[%s8] sm:$0x1]
    %v808 = vlaneseq
    %v809 = vshrl.u32 %v808, 7
    %v810 = vsub.s32 0, %v809
    %v811 = vrot.slane %v806, %v810
    %v821 = vunpack.c.l.b16 %v798
    %v822 = vunpack.c.l.b16 %v799
    %v823 = vunpack.c.l.b16 %v800
    %v824 = vunpack.c.l.b16 %v801
    %v825 = vunpack.c.l.b16 %v802
    %v826 = vunpack.c.l.b16 %v803
    %v827 = vunpack.c.l.b16 %v804
    %v828 = vunpack.c.l.b16 %v805
    %v829 = vpack.c.b16 %v822, %v821
    %v830 = vpack.c.b16 %v824, %v823
    %v831 = vpack.c.b16 %v826, %v825
    %v832 = vpack.c.b16 %v828, %v827
    %v838 = vsel %vm664, %v797, 0
    %840 = vmatprep.subr.bf16.mxu0 0
    %841 = vmatpush1.bf16.msra.mxu0 0
    %842 = vmatprep.subr.bf16.mxu0 0
    %843 = vmatpush1.bf16.msra.mxu0 0
    %844 = vmatprep.subr.bf16.mxu0 0
    %845 = vmatpush1.bf16.msra.mxu0 0
    %846 = vmatprep.subr.bf16.mxu0 0
    %847 = vmatpush1.bf16.msra.mxu0 0
    %848 = vmatprep.subr.bf16.mxu0 0
    %849 = vmatpush1.bf16.msra.mxu0 %v832
    %850 = vmatprep.subr.bf16.mxu0 0
    %851 = vmatpush1.bf16.msra.mxu0 %v831
    %852 = vmatprep.subr.bf16.mxu0 0
    %853 = vmatpush1.bf16.msra.mxu0 %v830
    %854 = vmatprep.subr.bf16.mxu0 0
    %855 = vmatpush1.bf16.msra.mxu0 %v829
    %856 = vmatprep.subr.bf16.mxu0 0
    %857 = vmatpush2.bf16.msra.mxu0 0
    %858 = vmatprep.subr.bf16.mxu0 0
    %859 = vmatpush2.bf16.msra.mxu0 0
    %860 = vmatprep.subr.bf16.mxu0 0
    %861 = vmatpush2.bf16.msra.mxu0 0
    %862 = vmatprep.subr.bf16.mxu0 0
    %863 = vmatpush2.bf16.msra.mxu0 0
    %864 = vmatprep.subr.bf16.mxu0 0
    %865 = vmatpush2.bf16.msra.mxu0 0
    %866 = vmatprep.subr.bf16.mxu0 0
    %867 = vmatpush2.bf16.msra.mxu0 0
    %868 = vmatprep.subr.bf16.mxu0 0
    %869 = vmatpush2.bf16.msra.mxu0 0
    %870 = vmatprep.subr.bf16.mxu0 0
    %871 = vmatpush2.bf16.msra.mxu0 0
    %872 = vmatprep.mubr.bf16.mxu0 0
    %873 = vmatmul.mubr.bf16.gmra.mxu0 %v838
    %v874 = vpop.f32.mrf.mxu0
    %v875 = vadd.f32 %v811, %v874
    %v876 = vpop.f32.mrf.mxu0
    %v877 = vpop.f32.mrf.mxu0
    %v878 = vadd.f32 %v811, %v877
    %v879 = vpop.f32.mrf.mxu0
    %880 = vdwg.mxu0
    %vm881 = vcmask 80896
    %v882 = vsel %vm881, %v875, -inf
    %883 = vmax.xlane.f32.xlu0 %v882
    %v884 = vpop.xlane.xlu0 %883
    %v885 = vsel %vm881, %v878, -inf
    %886 = vmax.xlane.f32.xlu0 %v885
    %v887 = vpop.xlane.xlu0 %886
    %v888 = vsub.f32 %v875, %v884
    %v889 = vsub.f32 %v878, %v887
    %v890 = vmul.f32 %v888, 1.442695
    %v891 = vpow.pop %v890
    %v892 = vmul.f32 %v889, 1.442695
    %v893 = vpow.pop %v892
    %v894 = vsel %vm881, %v891, 0.0
    %895 = vadd.xlane.f32.xlu0 %v894
    %v896 = vpop.xlane.xlu0 %895
    %v897 = vsel %vm881, %v893, 0.0
    %898 = vadd.xlane.f32.xlu0 %v897
    %v899 = vpop.xlane.xlu0 %898
    %v900 = vlog2.pop %v896
    %v901 = vmul.f32 %v900, 0.6931472
    %v902 = vlog2.pop %v899
    %v903 = vmul.f32 %v902, 0.6931472
    %v904 = vsub.f32 %v888, %v901
    %v905 = vsub.f32 %v889, %v903
    %906 = vst.msk [vmem:[#allocation2] sm:$0xff] %vm881, %v904
    %907 = vst.msk [vmem:[#allocation2 + $0x8] sm:$0xff] %vm881, %v905
    // Predicated region
    $region38: #{tpu_custom_call.1} parent=1 // pred_check
      _
    $region39: #{tpu_custom_call.1} parent=1 // pred_check_branch
      %909 = sbr.rel (0) target = $region41
    $region40: #{tpu_custom_call.1} parent=1 // pred_region
      %s911 = ssub.s32 256, 256
      %912 = vsyncadd [#allocation3], %s911
      %s913 = sshll.u32 [#allocation2], 4
      %s914 = int_to_ptr.vmem [resolvable:$true] %s913
      %919 = dma.vmem_to_hbm [thread:$0]  %s914, 256, %s9, [#allocation3], 128, 128, 8
    $region41: #{tpu_custom_call.1} parent=1 // pred_fallthru
      _
    // Predicated region
    $region42: #{tpu_custom_call.1} parent=1 // pred_check
      _
    $region43: #{tpu_custom_call.1} parent=1 // pred_check_branch
      %921 = sbr.rel (0) target = $region45
    $region44: #{tpu_custom_call.1} parent=1 // pred_region
      %922 = dma.done [#allocation3], 256
    $region45: #{tpu_custom_call.1} parent=1 // pred_fallthru
      _
    %923 = vsyncpa [#allocation3], 1

</llo_original>
